<compile_context>
chip_gen: v5e
topology: v5e:2x2
jax: 0.10.0
libtpu: 0.0.40
codegen_flags: <defaults>
</compile_context>

<pallas_src>
import functools

import jax
import jax.numpy as jnp
import numpy as np
from jax import lax
from jax.experimental import pallas as pl
from jax.experimental.pallas import tpu as pltpu


def _fused_double_conv_kernel(x_ref, w1_ref, b1_ref, w2_ref, b2_ref, o_ref, *, W):
    """Both conv layers for one batch element, fully fused in VMEM.

    Layout: channel-major with flattened spatial (H*W) on the lane axis.

    x_ref : (Cin,  HW)      flattened input (NCHW -> (N, C, H*W), per-batch block)
    w1_ref: (Cmid, 9*Cin)   layer-1 weights as an im2col matrix
    b1_ref: (Cmid, 1)
    w2_ref: (Cout, 9*Cmid)  layer-2 weights as an im2col matrix
    b2_ref: (Cout, 1)
    o_ref : (Cout, HW)      flattened output
    """
    HW = x_ref.shape[-1]
    PAD = 2 * W  # flat zero halo around the spatial axis; must be >= W + 1

    # Column-validity masks shared by both layers.  Row (h) out-of-bounds taps
    # are handled by the flat zero halo; only the w wrap-around needs masking.
    col = lax.broadcasted_iota(jnp.int32, (1, HW), 1)
    w_idx = col % W
    mask_l = w_idx >= 1          # valid positions for taps with dw == -1
    mask_r = w_idx <= W - 2      # valid positions for taps with dw == +1

    def im2col(v):
        # v: (C, HW) f32  ->  (9*C, HW) patch matrix, tap-major / channel-minor.
        C = v.shape[0]
        zpad = jnp.zeros((C, PAD), jnp.float32)
        vp = jnp.concatenate([zpad, v, zpad], axis=1)     # (C, HW + 2*PAD)
        rows = []
        for dh in (-1, 0, 1):
            for dw in (-1, 0, 1):
                d = dh * W + dw
                piece = vp[:, PAD + d: PAD + d + HW]      # static lane slice
                if dw == -1:
                    piece = jnp.where(mask_l, piece, 0.0)
                elif dw == 1:
                    piece = jnp.where(mask_r, piece, 0.0)
                rows.append(piece)
        return jnp.concatenate(rows, axis=0)              # (9*C, HW)

    x = x_ref[...].astype(jnp.float32)

    # Layer 1: Conv2d(Cin->Cmid, 3x3, pad=1) + bias + ReLU as ONE MXU matmul.
    h = jnp.dot(w1_ref[...], im2col(x), preferred_element_type=jnp.float32)
    h = jnp.maximum(h + b1_ref[...], 0.0)                 # (Cmid, HW), stays in VMEM

    # Layer 2: Conv2d(Cmid->Cout, 3x3, pad=1) + bias + ReLU; h never hits HBM.
    y = jnp.dot(w2_ref[...], im2col(h), preferred_element_type=jnp.float32)
    y = jnp.maximum(y + b2_ref[...], 0.0)                 # (Cout, HW)

    o_ref[...] = y.astype(o_ref.dtype)                    # lane-dense store (HW lanes)


def fused_double_conv(x_flat, w1_mat, b1_col, w2_mat, b2_col, *, W):
    """x_flat: (N, Cin, H*W).  Returns (N, Cout, H*W)."""
    N, Cin, HW = x_flat.shape
    Cmid = w1_mat.shape[0]
    Cout = w2_mat.shape[0]
    kernel = functools.partial(_fused_double_conv_kernel, W=W)
    return pl.pallas_call(
        kernel,
        out_shape=jax.ShapeDtypeStruct((N, Cout, HW), x_flat.dtype),
        grid=(N,),
        in_specs=[
            pl.BlockSpec((None, Cin, HW), lambda n: (n, 0, 0)),
            pl.BlockSpec((Cmid, 9 * Cin), lambda n: (0, 0)),
            pl.BlockSpec((Cmid, 1), lambda n: (0, 0)),
            pl.BlockSpec((Cout, 9 * Cmid), lambda n: (0, 0)),
            pl.BlockSpec((Cout, 1), lambda n: (0, 0)),
        ],
        out_specs=pl.BlockSpec((None, Cout, HW), lambda n: (n, 0, 0)),
        compiler_params=pltpu.CompilerParams(
            dimension_semantics=("parallel",)),   # batch-parallel (2 TCs on v7x)
    )(x_flat, w1_mat, b1_col, w2_mat, b2_col)


@jax.jit
def compressnn_forward(x_nchw, kparams):
    """Forward of CompressNNModel == internal_model(x). Input/output are NCHW."""
    N, Cin, H, W = x_nchw.shape
    x_flat = x_nchw.reshape(N, Cin, H * W)        # free, contiguous reshape
    y = fused_double_conv(x_flat, kparams["w1_mat"], kparams["b1"],
                          kparams["w2_mat"], kparams["b2"], W=W)
    return y.reshape(N, y.shape[1], H, W)         # already NCHW, no transpose


def init_params(key, c_in=4, c_mid=8, c_out=4):
    """Deterministic synthetic weights, PyTorch Conv2d-style uniform init (OIHW)."""
    k1, k2, k3, k4 = jax.random.split(key, 4)

    def conv_init(kw_key, kb_key, cin, cout):
        fan_in = cin * 9
        bound = 1.0 / np.sqrt(fan_in)
        w = jax.random.uniform(kw_key, (cout, cin, 3, 3), jnp.float32, -bound, bound)
        b = jax.random.uniform(kb_key, (cout,), jnp.float32, -bound, bound)
        return w, b

    w1, b1 = conv_init(k1, k2, c_in, c_mid)
    w2, b2 = conv_init(k3, k4, c_mid, c_out)
    return {"w1_oihw": w1, "b1": b1, "w2_oihw": w2, "b2": b2}


def kernel_params(params):
    """Host-side, one-time reshape of weights into the kernel's im2col layout."""
    def to_mat(w_oihw):
        cout, cin = w_oihw.shape[:2]
        # [co, ci, kh, kw] -> [co, kh, kw, ci] -> (co, 9*cin); matches the
        # patch-row ordering (tap-major, channel-minor) built by im2col().
        return jnp.transpose(w_oihw, (0, 2, 3, 1)).reshape(cout, 9 * cin)

    return {
        "w1_mat": to_mat(params["w1_oihw"]),
        "b1": params["b1"].reshape(-1, 1),
        "w2_mat": to_mat(params["w2_oihw"]),
        "b2": params["b2"].reshape(-1, 1),
    }


@jax.jit
def _reference_forward(x_nchw, params):
    """Pure-JAX reference (lax conv, NCHW/OIHW) for correctness checking."""
    dn = ("NCHW", "OIHW", "NCHW")
    h = lax.conv_general_dilated(x_nchw, params["w1_oihw"], (1, 1), "SAME",
                                 dimension_numbers=dn)
    h = jnp.maximum(h + params["b1"][None, :, None, None], 0.0)
    y = lax.conv_general_dilated(h, params["w2_oihw"], (1, 1), "SAME",
                                 dimension_numbers=dn)
    y = jnp.maximum(y + params["b2"][None, :, None, None], 0.0)
    return y


if __name__ == "__main__":
    key = jax.random.PRNGKey(0)
    kx, kp = jax.random.split(key)

    # Small shapes consistent with the module: batch=2, channels=4, spatial=16 (NCHW).
    x = jax.random.normal(kx, (2, 4, 16, 16), dtype=jnp.float32)
    params = init_params(kp)
    kparams = kernel_params(params)

    out = jax.block_until_ready(compressnn_forward(x, kparams))
    ref = jax.block_until_ready(_reference_forward(x, params))
    np.testing.assert_allclose(np.asarray(out), np.asarray(ref),
                               rtol=1e-5, atol=1e-5)

    print("KERNEL_OK")
</pallas_src>

<mosaic_0001>
module attributes {stable_mosaic.version = 11 : i64} {
  func.func @_fused_double_conv_kernel(%arg0: i32, %arg1: memref<1x4x256xf32, #tpu.memory_space<vmem>>, %arg2: memref<8x36xf32, #tpu.memory_space<vmem>>, %arg3: memref<8x1xf32, #tpu.memory_space<vmem>>, %arg4: memref<4x72xf32, #tpu.memory_space<vmem>>, %arg5: memref<4x1xf32, #tpu.memory_space<vmem>>, %arg6: memref<1x4x256xf32, #tpu.memory_space<vmem>>) attributes {dimension_semantics = [#tpu.dimension_semantics<parallel>], iteration_bounds = array<i64: 2>, scalar_prefetch = 0 : i64, scratch_operands = 0 : i64, tpu.core_type = #tpu.core_type<tc>, window_params = [{transform_indices = @transform_0, window_bounds = array<i64: 1, 4, 256>}, {pipeline_mode = #tpu.pipeline_mode<synchronous>, transform_indices = @transform_1, window_bounds = array<i64: 8, 36>}, {pipeline_mode = #tpu.pipeline_mode<synchronous>, transform_indices = @transform_2, window_bounds = array<i64: 8, 1>}, {pipeline_mode = #tpu.pipeline_mode<synchronous>, transform_indices = @transform_3, window_bounds = array<i64: 4, 72>}, {pipeline_mode = #tpu.pipeline_mode<synchronous>, transform_indices = @transform_4, window_bounds = array<i64: 4, 1>}, {transform_indices = @transform_5, window_bounds = array<i64: 1, 4, 256>}]} {
    %0 = tpu.iota {dimensions = array<i32: 1>} : vector<1x256xi32>
    %c16_i32 = arith.constant 16 : i32
    %c0_i32 = arith.constant 0 : i32
    %1 = arith.cmpi eq, %c16_i32, %c0_i32 : i32
    %c1_i32 = arith.constant 1 : i32
    %2 = arith.select %1, %c1_i32, %c16_i32 : i32
    %3 = vector.broadcast %2 : i32 to vector<1x256xi32>
    %4 = arith.remsi %0, %3 : vector<1x256xi32>
    %c0_i32_0 = arith.constant 0 : i32
    %5 = vector.broadcast %c0_i32_0 : i32 to vector<1x256xi32>
    %6 = arith.cmpi ne, %4, %5 : vector<1x256xi32>
    %c0_i32_1 = arith.constant 0 : i32
    %7 = vector.broadcast %c0_i32_1 : i32 to vector<1x256xi32>
    %8 = arith.cmpi slt, %4, %7 : vector<1x256xi32>
    %c0_i32_2 = arith.constant 0 : i32
    %9 = arith.cmpi slt, %2, %c0_i32_2 : i32
    %10 = vector.broadcast %9 : i1 to vector<1x256xi1>
    %11 = vector.broadcast %10 : vector<1x256xi1> to vector<1x256xi1>
    %12 = arith.xori %8, %11 : vector<1x256xi1>
    %13 = arith.andi %12, %6 : vector<1x256xi1>
    %14 = vector.broadcast %2 : i32 to vector<1x256xi32>
    %15 = arith.addi %4, %14 : vector<1x256xi32>
    %16 = arith.select %13, %15, %4 : vector<1x256xi1>, vector<1x256xi32>
    %c1_i32_3 = arith.constant 1 : i32
    %17 = vector.broadcast %c1_i32_3 : i32 to vector<1x256xi32>
    %18 = arith.cmpi sge, %16, %17 : vector<1x256xi32>
    %c14_i32 = arith.constant 14 : i32
    %19 = vector.broadcast %c14_i32 : i32 to vector<1x256xi32>
    %20 = arith.cmpi sle, %16, %19 : vector<1x256xi32>
    %c0 = arith.constant 0 : index
    %c0_4 = arith.constant 0 : index
    %c0_5 = arith.constant 0 : index
    %21 = vector.load %arg1[%c0, %c0_4, %c0_5] : memref<1x4x256xf32, #tpu.memory_space<vmem>>, vector<1x4x256xf32>
    %22 = vector.shape_cast %21 : vector<1x4x256xf32> to vector<4x256xf32>
    %c0_6 = arith.constant 0 : index
    %c0_7 = arith.constant 0 : index
    %23 = vector.load %arg2[%c0_6, %c0_7] : memref<8x36xf32, #tpu.memory_space<vmem>>, vector<8x36xf32>
    %cst = arith.constant 0.000000e+00 : f32
    %24 = vector.broadcast %cst : f32 to vector<4x32xf32>
    %25 = tpu.concatenate %24, %22, %24 in 1 : vector<4x32xf32>, vector<4x256xf32>, vector<4x32xf32> -> vector<4x320xf32>
    %26 = vector.extract_strided_slice %25 {offsets = [0, 15], sizes = [4, 256], strides = [1, 1]} : vector<4x320xf32> to vector<4x256xf32>
    %cst_8 = arith.constant 0.000000e+00 : f32
    %27 = vector.shape_cast %18 : vector<1x256xi1> to vector<1x256xi1>
    %28 = vector.broadcast %27 : vector<1x256xi1> to vector<4x256xi1>
    %29 = vector.broadcast %cst_8 : f32 to vector<4x256xf32>
    %30 = arith.select %28, %26, %29 : vector<4x256xi1>, vector<4x256xf32>
    %31 = vector.extract_strided_slice %25 {offsets = [0, 16], sizes = [4, 256], strides = [1, 1]} : vector<4x320xf32> to vector<4x256xf32>
    %32 = vector.extract_strided_slice %25 {offsets = [0, 17], sizes = [4, 256], strides = [1, 1]} : vector<4x320xf32> to vector<4x256xf32>
    %cst_9 = arith.constant 0.000000e+00 : f32
    %33 = vector.shape_cast %20 : vector<1x256xi1> to vector<1x256xi1>
    %34 = vector.broadcast %33 : vector<1x256xi1> to vector<4x256xi1>
    %35 = vector.broadcast %cst_9 : f32 to vector<4x256xf32>
    %36 = arith.select %34, %32, %35 : vector<4x256xi1>, vector<4x256xf32>
    %37 = vector.extract_strided_slice %25 {offsets = [0, 31], sizes = [4, 256], strides = [1, 1]} : vector<4x320xf32> to vector<4x256xf32>
    %cst_10 = arith.constant 0.000000e+00 : f32
    %38 = vector.shape_cast %18 : vector<1x256xi1> to vector<1x256xi1>
    %39 = vector.broadcast %38 : vector<1x256xi1> to vector<4x256xi1>
    %40 = vector.broadcast %cst_10 : f32 to vector<4x256xf32>
    %41 = arith.select %39, %37, %40 : vector<4x256xi1>, vector<4x256xf32>
    %42 = vector.extract_strided_slice %25 {offsets = [0, 32], sizes = [4, 256], strides = [1, 1]} : vector<4x320xf32> to vector<4x256xf32>
    %43 = vector.extract_strided_slice %25 {offsets = [0, 33], sizes = [4, 256], strides = [1, 1]} : vector<4x320xf32> to vector<4x256xf32>
    %cst_11 = arith.constant 0.000000e+00 : f32
    %44 = vector.shape_cast %20 : vector<1x256xi1> to vector<1x256xi1>
    %45 = vector.broadcast %44 : vector<1x256xi1> to vector<4x256xi1>
    %46 = vector.broadcast %cst_11 : f32 to vector<4x256xf32>
    %47 = arith.select %45, %43, %46 : vector<4x256xi1>, vector<4x256xf32>
    %48 = vector.extract_strided_slice %25 {offsets = [0, 47], sizes = [4, 256], strides = [1, 1]} : vector<4x320xf32> to vector<4x256xf32>
    %cst_12 = arith.constant 0.000000e+00 : f32
    %49 = vector.shape_cast %18 : vector<1x256xi1> to vector<1x256xi1>
    %50 = vector.broadcast %49 : vector<1x256xi1> to vector<4x256xi1>
    %51 = vector.broadcast %cst_12 : f32 to vector<4x256xf32>
    %52 = arith.select %50, %48, %51 : vector<4x256xi1>, vector<4x256xf32>
    %53 = vector.extract_strided_slice %25 {offsets = [0, 48], sizes = [4, 256], strides = [1, 1]} : vector<4x320xf32> to vector<4x256xf32>
    %54 = vector.extract_strided_slice %25 {offsets = [0, 49], sizes = [4, 256], strides = [1, 1]} : vector<4x320xf32> to vector<4x256xf32>
    %cst_13 = arith.constant 0.000000e+00 : f32
    %55 = vector.shape_cast %20 : vector<1x256xi1> to vector<1x256xi1>
    %56 = vector.broadcast %55 : vector<1x256xi1> to vector<4x256xi1>
    %57 = vector.broadcast %cst_13 : f32 to vector<4x256xf32>
    %58 = arith.select %56, %54, %57 : vector<4x256xi1>, vector<4x256xf32>
    %59 = tpu.concatenate %30, %31, %36, %41, %42, %47, %52, %53, %58 in 0 : vector<4x256xf32>, vector<4x256xf32>, vector<4x256xf32>, vector<4x256xf32>, vector<4x256xf32>, vector<4x256xf32>, vector<4x256xf32>, vector<4x256xf32>, vector<4x256xf32> -> vector<36x256xf32>
    %cst_14 = arith.constant dense<0.000000e+00> : vector<8x256xf32>
    %60 = tpu.matmul %23, %59, %cst_14 {dimension_numbers = #tpu.dot_dimension_numbers<[1], [0], [0], [1], [0, 0, 1, 1], [], []>} : vector<8x36xf32>, vector<36x256xf32>, vector<8x256xf32> -> vector<8x256xf32>
    %c0_15 = arith.constant 0 : index
    %c0_16 = arith.constant 0 : index
    %61 = vector.load %arg3[%c0_15, %c0_16] : memref<8x1xf32, #tpu.memory_space<vmem>>, vector<8x1xf32>
    %62 = vector.broadcast %61 : vector<8x1xf32> to vector<8x256xf32>
    %63 = arith.addf %60, %62 : vector<8x256xf32>
    %cst_17 = arith.constant 0.000000e+00 : f32
    %64 = vector.broadcast %cst_17 : f32 to vector<8x256xf32>
    %65 = arith.maximumf %63, %64 : vector<8x256xf32>
    %c0_18 = arith.constant 0 : index
    %c0_19 = arith.constant 0 : index
    %66 = vector.load %arg4[%c0_18, %c0_19] : memref<4x72xf32, #tpu.memory_space<vmem>>, vector<4x72xf32>
    %cst_20 = arith.constant 0.000000e+00 : f32
    %67 = vector.broadcast %cst_20 : f32 to vector<8x32xf32>
    %68 = tpu.concatenate %67, %65, %67 in 1 : vector<8x32xf32>, vector<8x256xf32>, vector<8x32xf32> -> vector<8x320xf32>
    %69 = vector.extract_strided_slice %68 {offsets = [0, 15], sizes = [8, 256], strides = [1, 1]} : vector<8x320xf32> to vector<8x256xf32>
    %cst_21 = arith.constant 0.000000e+00 : f32
    %70 = vector.shape_cast %18 : vector<1x256xi1> to vector<1x256xi1>
    %71 = vector.broadcast %70 : vector<1x256xi1> to vector<8x256xi1>
    %72 = vector.broadcast %cst_21 : f32 to vector<8x256xf32>
    %73 = arith.select %71, %69, %72 : vector<8x256xi1>, vector<8x256xf32>
    %74 = vector.extract_strided_slice %68 {offsets = [0, 16], sizes = [8, 256], strides = [1, 1]} : vector<8x320xf32> to vector<8x256xf32>
    %75 = vector.extract_strided_slice %68 {offsets = [0, 17], sizes = [8, 256], strides = [1, 1]} : vector<8x320xf32> to vector<8x256xf32>
    %cst_22 = arith.constant 0.000000e+00 : f32
    %76 = vector.shape_cast %20 : vector<1x256xi1> to vector<1x256xi1>
    %77 = vector.broadcast %76 : vector<1x256xi1> to vector<8x256xi1>
    %78 = vector.broadcast %cst_22 : f32 to vector<8x256xf32>
    %79 = arith.select %77, %75, %78 : vector<8x256xi1>, vector<8x256xf32>
    %80 = vector.extract_strided_slice %68 {offsets = [0, 31], sizes = [8, 256], strides = [1, 1]} : vector<8x320xf32> to vector<8x256xf32>
    %cst_23 = arith.constant 0.000000e+00 : f32
    %81 = vector.shape_cast %18 : vector<1x256xi1> to vector<1x256xi1>
    %82 = vector.broadcast %81 : vector<1x256xi1> to vector<8x256xi1>
    %83 = vector.broadcast %cst_23 : f32 to vector<8x256xf32>
    %84 = arith.select %82, %80, %83 : vector<8x256xi1>, vector<8x256xf32>
    %85 = vector.extract_strided_slice %68 {offsets = [0, 32], sizes = [8, 256], strides = [1, 1]} : vector<8x320xf32> to vector<8x256xf32>
    %86 = vector.extract_strided_slice %68 {offsets = [0, 33], sizes = [8, 256], strides = [1, 1]} : vector<8x320xf32> to vector<8x256xf32>
    %cst_24 = arith.constant 0.000000e+00 : f32
    %87 = vector.shape_cast %20 : vector<1x256xi1> to vector<1x256xi1>
    %88 = vector.broadcast %87 : vector<1x256xi1> to vector<8x256xi1>
    %89 = vector.broadcast %cst_24 : f32 to vector<8x256xf32>
    %90 = arith.select %88, %86, %89 : vector<8x256xi1>, vector<8x256xf32>
    %91 = vector.extract_strided_slice %68 {offsets = [0, 47], sizes = [8, 256], strides = [1, 1]} : vector<8x320xf32> to vector<8x256xf32>
    %cst_25 = arith.constant 0.000000e+00 : f32
    %92 = vector.shape_cast %18 : vector<1x256xi1> to vector<1x256xi1>
    %93 = vector.broadcast %92 : vector<1x256xi1> to vector<8x256xi1>
    %94 = vector.broadcast %cst_25 : f32 to vector<8x256xf32>
    %95 = arith.select %93, %91, %94 : vector<8x256xi1>, vector<8x256xf32>
    %96 = vector.extract_strided_slice %68 {offsets = [0, 48], sizes = [8, 256], strides = [1, 1]} : vector<8x320xf32> to vector<8x256xf32>
    %97 = vector.extract_strided_slice %68 {offsets = [0, 49], sizes = [8, 256], strides = [1, 1]} : vector<8x320xf32> to vector<8x256xf32>
    %cst_26 = arith.constant 0.000000e+00 : f32
    %98 = vector.shape_cast %20 : vector<1x256xi1> to vector<1x256xi1>
    %99 = vector.broadcast %98 : vector<1x256xi1> to vector<8x256xi1>
    %100 = vector.broadcast %cst_26 : f32 to vector<8x256xf32>
    %101 = arith.select %99, %97, %100 : vector<8x256xi1>, vector<8x256xf32>
    %102 = tpu.concatenate %73, %74, %79, %84, %85, %90, %95, %96, %101 in 0 : vector<8x256xf32>, vector<8x256xf32>, vector<8x256xf32>, vector<8x256xf32>, vector<8x256xf32>, vector<8x256xf32>, vector<8x256xf32>, vector<8x256xf32>, vector<8x256xf32> -> vector<72x256xf32>
    %cst_27 = arith.constant dense<0.000000e+00> : vector<4x256xf32>
    %103 = tpu.matmul %66, %102, %cst_27 {dimension_numbers = #tpu.dot_dimension_numbers<[1], [0], [0], [1], [0, 0, 1, 1], [], []>} : vector<4x72xf32>, vector<72x256xf32>, vector<4x256xf32> -> vector<4x256xf32>
    %c0_28 = arith.constant 0 : index
    %c0_29 = arith.constant 0 : index
    %104 = vector.load %arg5[%c0_28, %c0_29] : memref<4x1xf32, #tpu.memory_space<vmem>>, vector<4x1xf32>
    %105 = vector.broadcast %104 : vector<4x1xf32> to vector<4x256xf32>
    %106 = arith.addf %103, %105 : vector<4x256xf32>
    %cst_30 = arith.constant 0.000000e+00 : f32
    %107 = vector.broadcast %cst_30 : f32 to vector<4x256xf32>
    %108 = arith.maximumf %106, %107 : vector<4x256xf32>
    %c0_31 = arith.constant 0 : index
    %c0_32 = arith.constant 0 : index
    %c0_33 = arith.constant 0 : index
    %109 = vector.load %arg6[%c0_31, %c0_32, %c0_33] : memref<1x4x256xf32, #tpu.memory_space<vmem>>, vector<1x4x256xf32>
    %110 = vector.shape_cast %109 : vector<1x4x256xf32> to vector<4x256xf32>
    %111 = vector.shape_cast %108 : vector<4x256xf32> to vector<1x4x256xf32>
    tpu.vector_store %arg6[%c0_31, %c0_32, %c0_33], %111 {strides = array<i32>} : memref<1x4x256xf32, #tpu.memory_space<vmem>>, vector<1x4x256xf32>,
    return
  }
  func.func @transform_0(%arg0: i32) -> (i32, i32, i32) {
    %c0_i32 = arith.constant 0 : i32
    %c0_i32_0 = arith.constant 0 : i32
    %c0_i32_1 = arith.constant 0 : i32
    return %arg0, %c0_i32, %c0_i32_0 : i32, i32, i32
  }
  func.func @transform_1(%arg0: i32) -> (i32, i32) {
    %c0_i32 = arith.constant 0 : i32
    %c0_i32_0 = arith.constant 0 : i32
    %c0_i32_1 = arith.constant 0 : i32
    return %c0_i32, %c0_i32_0 : i32, i32
  }
  func.func @transform_2(%arg0: i32) -> (i32, i32) {
    %c0_i32 = arith.constant 0 : i32
    %c0_i32_0 = arith.constant 0 : i32
    %c0_i32_1 = arith.constant 0 : i32
    return %c0_i32, %c0_i32_0 : i32, i32
  }
  func.func @transform_3(%arg0: i32) -> (i32, i32) {
    %c0_i32 = arith.constant 0 : i32
    %c0_i32_0 = arith.constant 0 : i32
    %c0_i32_1 = arith.constant 0 : i32
    return %c0_i32, %c0_i32_0 : i32, i32
  }
  func.func @transform_4(%arg0: i32) -> (i32, i32) {
    %c0_i32 = arith.constant 0 : i32
    %c0_i32_0 = arith.constant 0 : i32
    %c0_i32_1 = arith.constant 0 : i32
    return %c0_i32, %c0_i32_0 : i32, i32
  }
  func.func @transform_5(%arg0: i32) -> (i32, i32, i32) {
    %c0_i32 = arith.constant 0 : i32
    %c0_i32_0 = arith.constant 0 : i32
    %c0_i32_1 = arith.constant 0 : i32
    return %arg0, %c0_i32, %c0_i32_0 : i32, i32, i32
  }
}

</mosaic_0001>

<llo_original>
// kernel: compressnn_forward.1
$region0: #{compressnn_forward.1}
  #allocation0 [shape = 'u32[]', space=smem, size = 0x4, offset = 0x4, fixed_abs, tag = 'smem constant byte address 0x4 - core index']
  #allocation1 [shape = 'u32[72,128]{1,0:T(1,128)}', space=vmem, size = 0x9000, scoped, tag = 'internal scratch']
  %s0 = inlined_call_operand.vmem [shape: f32[2,4,256], index: 0, kind: input, shape index: {}]
  %s1 = inlined_call_operand.vmem [shape: f32[8,36], index: 1, kind: input, shape index: {}]
  %s2 = inlined_call_operand.vmem [shape: f32[8,1], index: 2, kind: input, shape index: {}]
  %s3 = inlined_call_operand.vmem [shape: f32[4,72], index: 3, kind: input, shape index: {}]
  %s4 = inlined_call_operand.vmem [shape: f32[4,1], index: 4, kind: input, shape index: {}]
  %s5 = inlined_call_operand.vmem [shape: f32[2,4,256], index: 5, kind: output, shape index: {}]
  %s6 = sld [smem:[#allocation0]]
  $region53: #{compressnn_forward.1} parent=0
    _
  %s8 = ssub.s32 1, %s6
  %s9 = scalar_select 0, %s8, %s6
  loop: start=0, step=1, limit=4
  $region2: #{compressnn_forward.1} parent=0 // loop_pre_header
    _
  $region3: #{compressnn_forward.1} parent=0 // loop_header
    %s11 = sphi 0, %s15
    %p12 = scmp.ge.s32.totalorder %s11, 4
    %s21 = sphi 0, %s23
    %s24 = sphi 0, %s21
    %s25 = sphi 0, %s24
    %s41 = sphi 0, %s25
    %s45 = sphi 0, %s45
    %s47 = sphi 0, %s45
    %s48 = sphi 0, %s47
    %s62 = sphi 0, %s48
    %s66 = sphi 0, %s66
    %s68 = sphi 0, %s66
    %s69 = sphi 0, %s68
    %s83 = sphi 0, %s69
    %s87 = sphi 0, %s87
    %s89 = sphi 0, %s87
    %s90 = sphi 0, %s89
    %s104 = sphi 0, %s90
    %s108 = sphi 0, %s108
    %s110 = sphi 0, %s108
    %s111 = sphi 0, %s110
    %s125 = sphi 0, %s111
    %s131 = sphi 0, %s133
    %s134 = sphi 0, %s131
    %s135 = sphi 0, %s134
    %s151 = sphi 0, %s135
  $region4: #{compressnn_forward.1} parent=0 // loop_header_branch
    %14 = sbr.rel (%p12) target = $region8
  $region5: #{compressnn_forward.1} parent=0 // loop_body
    %s16 = ssub.s32 %s11, 1
    %s17 = ssub.s32 %s11, 2
    %s18 = sadd.s32 %s11, 1
    %s19 = ssub.s32 %s11, %s18
    %p20 = scmp.eq.s32.totalorder %s19, 0
    %s22 = sadd.s32 %s21, 1
    %s23 = scalar_select %p20, %s21, %s22
    %p26 = pneg %p20
    %p27 = scmp.eq.s32.totalorder %s11, 1
    %p28 = por %p26, %p27
    %p29 = scmp.ne.s32.totalorder %s21, %s24
    %p30 = scmp.eq.s32.totalorder %s11, 0
    %p31 = por %p29, %p30
    %p32 = scmp.ne.s32.totalorder %s21, %s24
    %p33 = scmp.eq.s32.totalorder %s16, 1
    %p34 = por %p32, %p33
    %p35 = scmp.ne.s32.totalorder %s24, %s25
    %p36 = scmp.eq.s32.totalorder %s16, 0
    %p37 = por %p35, %p36
    %p38 = scmp.ne.s32.totalorder %s24, %s25
    %p39 = scmp.eq.s32.totalorder %s17, 1
    %p40 = por %p38, %p39
    %p42 = scmp.ne.s32.totalorder %s25, %s41
    %p43 = scmp.eq.s32.totalorder %s17, 0
    %p44 = por %p42, %p43
    %s46 = sadd.s32 %s45, 1
    %p49 = scmp.eq.s32.totalorder %s11, 1
    %p50 = scmp.ne.s32.totalorder %s45, %s47
    %p51 = scmp.eq.s32.totalorder %s11, 0
    %p52 = por %p50, %p51
    %p53 = scmp.ne.s32.totalorder %s45, %s47
    %p54 = scmp.eq.s32.totalorder %s16, 1
    %p55 = por %p53, %p54
    %p56 = scmp.ne.s32.totalorder %s47, %s48
    %p57 = scmp.eq.s32.totalorder %s16, 0
    %p58 = por %p56, %p57
    %p59 = scmp.ne.s32.totalorder %s47, %s48
    %p60 = scmp.eq.s32.totalorder %s17, 1
    %p61 = por %p59, %p60
    %p63 = scmp.ne.s32.totalorder %s48, %s62
    %p64 = scmp.eq.s32.totalorder %s17, 0
    %p65 = por %p63, %p64
    %s67 = sadd.s32 %s66, 1
    %p70 = scmp.eq.s32.totalorder %s11, 1
    %p71 = scmp.ne.s32.totalorder %s66, %s68
    %p72 = scmp.eq.s32.totalorder %s11, 0
    %p73 = por %p71, %p72
    %p74 = scmp.ne.s32.totalorder %s66, %s68
    %p75 = scmp.eq.s32.totalorder %s16, 1
    %p76 = por %p74, %p75
    %p77 = scmp.ne.s32.totalorder %s68, %s69
    %p78 = scmp.eq.s32.totalorder %s16, 0
    %p79 = por %p77, %p78
    %p80 = scmp.ne.s32.totalorder %s68, %s69
    %p81 = scmp.eq.s32.totalorder %s17, 1
    %p82 = por %p80, %p81
    %p84 = scmp.ne.s32.totalorder %s69, %s83
    %p85 = scmp.eq.s32.totalorder %s17, 0
    %p86 = por %p84, %p85
    %s88 = sadd.s32 %s87, 1
    %p91 = scmp.eq.s32.totalorder %s11, 1
    %p92 = scmp.ne.s32.totalorder %s87, %s89
    %p93 = scmp.eq.s32.totalorder %s11, 0
    %p94 = por %p92, %p93
    %p95 = scmp.ne.s32.totalorder %s87, %s89
    %p96 = scmp.eq.s32.totalorder %s16, 1
    %p97 = por %p95, %p96
    %p98 = scmp.ne.s32.totalorder %s89, %s90
    %p99 = scmp.eq.s32.totalorder %s16, 0
    %p100 = por %p98, %p99
    %p101 = scmp.ne.s32.totalorder %s89, %s90
    %p102 = scmp.eq.s32.totalorder %s17, 1
    %p103 = por %p101, %p102
    %p105 = scmp.ne.s32.totalorder %s90, %s104
    %p106 = scmp.eq.s32.totalorder %s17, 0
    %p107 = por %p105, %p106
    %s109 = sadd.s32 %s108, 1
    %p112 = scmp.eq.s32.totalorder %s11, 1
    %p113 = scmp.ne.s32.totalorder %s108, %s110
    %p114 = scmp.eq.s32.totalorder %s11, 0
    %p115 = por %p113, %p114
    %p116 = scmp.ne.s32.totalorder %s108, %s110
    %p117 = scmp.eq.s32.totalorder %s16, 1
    %p118 = por %p116, %p117
    %p119 = scmp.ne.s32.totalorder %s110, %s111
    %p120 = scmp.eq.s32.totalorder %s16, 0
    %p121 = por %p119, %p120
    %p122 = scmp.ne.s32.totalorder %s110, %s111
    %p123 = scmp.eq.s32.totalorder %s17, 1
    %p124 = por %p122, %p123
    %p126 = scmp.ne.s32.totalorder %s111, %s125
    %p127 = scmp.eq.s32.totalorder %s17, 0
    %p128 = por %p126, %p127
    %s129 = ssub.s32 %s11, %s18
    %p130 = scmp.eq.s32.totalorder %s129, 0
    %s132 = sadd.s32 %s131, 1
    %s133 = scalar_select %p130, %s131, %s132
    %p136 = pneg %p130
    %p137 = scmp.eq.s32.totalorder %s11, 1
    %p138 = por %p136, %p137
    %p139 = scmp.ne.s32.totalorder %s131, %s134
    %p140 = scmp.eq.s32.totalorder %s11, 0
    %p141 = por %p139, %p140
    %p142 = scmp.ne.s32.totalorder %s131, %s134
    %p143 = scmp.eq.s32.totalorder %s16, 1
    %p144 = por %p142, %p143
    %p145 = scmp.ne.s32.totalorder %s134, %s135
    %p146 = scmp.eq.s32.totalorder %s16, 0
    %p147 = por %p145, %p146
    %p148 = scmp.ne.s32.totalorder %s134, %s135
    %p149 = scmp.eq.s32.totalorder %s17, 1
    %p150 = por %p148, %p149
    %p152 = scmp.ne.s32.totalorder %s135, %s151
    %p153 = scmp.eq.s32.totalorder %s17, 0
    %p154 = por %p152, %p153
    %p155 = scmp.le.s32.totalorder 1, %s11
    %p156 = scmp.lt.s32.totalorder %s11, 3
    %p157 = pnand %p155, %p156
    %p158 = pneg %p157
    // Predicated region
    $region9: #{compressnn_forward.1} parent=5 // pred_check
      _
    $region10: #{compressnn_forward.1} parent=5 // pred_check_branch
      %160 = sbr.rel (%p157) target = $region12
    $region11: #{compressnn_forward.1} parent=5 // pred_region
      %s161 = ssub.s32 %s11, 1
      // Predicated region
      $region13: #{compressnn_forward.1} parent=11 // pred_check
        %p162 = pneg %p58
      $region14: #{compressnn_forward.1} parent=11 // pred_check_branch
        %164 = sbr.rel (%p162) target = $region16
      $region15: #{compressnn_forward.1} parent=11 // pred_region
        _
      $region16: #{compressnn_forward.1} parent=11 // pred_fallthru
        _
      // Predicated region
      $region17: #{compressnn_forward.1} parent=11 // pred_check
        %p165 = pneg %p79
      $region18: #{compressnn_forward.1} parent=11 // pred_check_branch
        %167 = sbr.rel (%p165) target = $region20
      $region19: #{compressnn_forward.1} parent=11 // pred_region
        _
      $region20: #{compressnn_forward.1} parent=11 // pred_fallthru
        _
      // Predicated region
      $region21: #{compressnn_forward.1} parent=11 // pred_check
        %p168 = pneg %p100
      $region22: #{compressnn_forward.1} parent=11 // pred_check_branch
        %170 = sbr.rel (%p168) target = $region24
      $region23: #{compressnn_forward.1} parent=11 // pred_region
        _
      $region24: #{compressnn_forward.1} parent=11 // pred_fallthru
        _
      // Predicated region
      $region25: #{compressnn_forward.1} parent=11 // pred_check
        %p171 = pneg %p121
      $region26: #{compressnn_forward.1} parent=11 // pred_check_branch
        %173 = sbr.rel (%p171) target = $region28
      $region27: #{compressnn_forward.1} parent=11 // pred_region
        _
      $region28: #{compressnn_forward.1} parent=11 // pred_fallthru
        _
    $region12: #{compressnn_forward.1} parent=5 // pred_fallthru
      _
    %p174 = scmp.lt.s32.totalorder %s11, 2
    // Predicated region
    $region29: #{compressnn_forward.1} parent=5 // pred_check
      %p175 = pneg %p174
    $region30: #{compressnn_forward.1} parent=5 // pred_check_branch
      %177 = sbr.rel (%p175) target = $region32
    $region31: #{compressnn_forward.1} parent=5 // pred_region
      // Predicated region
      $region33: #{compressnn_forward.1} parent=31 // pred_check
        %p178 = pneg %p31
      $region34: #{compressnn_forward.1} parent=31 // pred_check_branch
        %180 = sbr.rel (%p178) target = $region36
      $region35: #{compressnn_forward.1} parent=31 // pred_region
        %p181 = scmp.lt.s32.totalorder %s11, 1
        %s182 = scalar_select %p181, %s11, 1
        %s183 = smul.addr %s182, 2
        %s184 = smul.addr %s183, 4
        %s185 = scalar_lea.vmem %s0, %s184
      $region36: #{compressnn_forward.1} parent=31 // pred_fallthru
        _
    $region32: #{compressnn_forward.1} parent=5 // pred_fallthru
      _
    %p186 = scmp.le.s32.totalorder 1, %s11
    %p187 = scmp.lt.s32.totalorder %s11, 3
    %p188 = pnand %p186, %p187
    %p189 = pneg %p188
    // Predicated region
    $region37: #{compressnn_forward.1} parent=5 // pred_check
      _
    $region38: #{compressnn_forward.1} parent=5 // pred_check_branch
      %191 = sbr.rel (%p188) target = $region40
    $region39: #{compressnn_forward.1} parent=5 // pred_region
      %s192 = ssub.s32 %s11, 1
      %p193 = scmp.lt.s32.totalorder %s16, 1
      %s194 = scalar_select %p193, %s16, 1
      %s195 = smul.addr %s194, 2
      %s196 = smul.addr %s195, 4
      %s197 = scalar_lea.vmem %s0, %s196
      %p198 = pneg %p37
      %p199 = pneg %p34
      %p200 = pneg %p58
      %p201 = pneg %p55
      %p202 = pneg %p79
      %p203 = pneg %p76
      %p204 = pneg %p100
      %p205 = pneg %p97
      %p206 = pneg %p121
      %p207 = pneg %p118
      %p208 = pneg %p147
      %p209 = pneg %p144
      %p210 = scmp.lt.s32.totalorder %s16, 1
      %s211 = scalar_select %p210, %s16, 1
      %s212 = smul.addr %s211, 2
      %s213 = smul.addr %s212, 4
      %s214 = scalar_lea.vmem %s5, %s213
      %p215 = scmp.lt.s32.totalorder %s16, 1
      %s216 = scalar_select %p215, %s16, 1
      %s217 = smul.addr %s216, 2
      %s218 = smul.addr %s217, 4
      %s219 = scalar_lea.vmem %s0, %s218
      %p220 = scmp.lt.s32.totalorder %s16, 1
      %s221 = scalar_select %p220, %s16, 1
      %s222 = smul.addr %s221, 2
      %s223 = smul.addr %s222, 4
      %s224 = scalar_lea.vmem %s5, %s223
      %v225 = vlaneseq
      %v226 = vand.u32 %v225, 127
      %v227 = vadd.s32 %v226, 128
      %vm228 = vcmp.lt.s32.totalorder %v226, 0
      %v229 = vsub.s32 0, %v226
      %v230 = vsel %vm228, %v229, %v226
      %v231 = vshrl.u32 %v230, 4
      %v232 = vand.u32 %v230, 15
      %v233 = vsub.s32 0, %v232
      %v234 = vsel %vm228, %v233, %v232
      %vm235 = vcmp.lt.s32.totalorder %v227, 0
      %v236 = vsub.s32 0, %v227
      %v237 = vsel %vm235, %v236, %v227
      %v238 = vshrl.u32 %v237, 4
      %v239 = vand.u32 %v237, 15
      %v240 = vsub.s32 0, %v239
      %v241 = vsel %vm235, %v240, %v239
      %vm242 = vcmp.ne.s32.totalorder %v234, 0
      %vm243 = vcmp.ne.s32.totalorder %v241, 0
      %vm244 = vcmp.lt.s32.totalorder %v234, 0
      %vm245 = vcmp.lt.s32.totalorder %v241, 0
      %vm246 = vmand %vm244, %vm242
      %vm247 = vmand %vm245, %vm243
      %v248 = vadd.s32 %v234, 16
      %v249 = vadd.s32 %v241, 16
      %v250 = vsel %vm246, %v248, %v234
      %v251 = vsel %vm247, %v249, %v241
      %vm252 = vcmp.ge.s32.totalorder %v250, 1
      %vm253 = vcmp.ge.s32.totalorder %v251, 1
      %vm254 = vcmp.le.s32.totalorder %v250, 14
      %vm255 = vcmp.le.s32.totalorder %v251, 14
      %v256 = vld [vmem:[%s219] sm:$0xff]
      %v257 = vld [vmem:[%s1] sm:$0xff]
      %259 = vst [vmem:[#allocation1] ss:$2 sm:$0xff] %v256
      %v260 = vld.sshfl [vmem:[#allocation1] sm:$0xff pattern:$0x75316420]
      %v261 = vld.sshfl [vmem:[#allocation1 + $0x8] sm:$0xff pattern:$0x75316420]
      %262 = vrot.lane.b32.xlu0 %v260, 32
      %v263 = vpop.permute.xlu0 %262
      %264 = vrot.lane.b32.xlu0 %v261, 32
      %v265 = vpop.permute.xlu0 %264
      %vm266 = vcmask 261120
      %v267 = vsel %vm266, %v263, %v265
      %v270 = vsel %vm266, 0.0, %v263
      %v271 = vsel %vm266, %v265, 0.0
      %v272 = vsel %vm252, 1, 0
      %v273 = vsel %vm253, 1, 0
      %vm274 = vcmp.eq.s32.totalorder %v272, 1
      %vm275 = vcmp.eq.s32.totalorder %v273, 1
      %278 = vrot.lane.b32.xlu0 %v270, 113
      %v279 = vpop.permute.xlu0 %278
      %280 = vrot.lane.b32.xlu0 %v267, 113
      %v281 = vpop.permute.xlu0 %280
      %282 = vrot.lane.b32.xlu0 %v271, 113
      %v283 = vpop.permute.xlu0 %282
      %vm284 = vcmask 924672
      %v285 = vsel %vm284, %v279, %v281
      %v286 = vsel %vm284, %v281, %v283
      %v289 = vsel %vm274, %v285, 0.0
      %v290 = vsel %vm275, %v286, 0.0
      %v291 = vsel %vm254, 1, 0
      %v292 = vsel %vm255, 1, 0
      %vm293 = vcmp.eq.s32.totalorder %v291, 1
      %vm294 = vcmp.eq.s32.totalorder %v292, 1
      %295 = vrot.lane.b32.xlu0 %v270, 111
      %v296 = vpop.permute.xlu0 %295
      %297 = vrot.lane.b32.xlu0 %v267, 111
      %v298 = vpop.permute.xlu0 %297
      %299 = vrot.lane.b32.xlu0 %v271, 111
      %v300 = vpop.permute.xlu0 %299
      %vm301 = vcmask 908288
      %v302 = vsel %vm301, %v296, %v298
      %v303 = vsel %vm301, %v298, %v300
      %v306 = vsel %vm293, %v302, 0.0
      %v307 = vsel %vm294, %v303, 0.0
      %308 = vrot.lane.b32.xlu0 %v270, 97
      %v309 = vpop.permute.xlu0 %308
      %310 = vrot.lane.b32.xlu0 %v267, 97
      %v311 = vpop.permute.xlu0 %310
      %312 = vrot.lane.b32.xlu0 %v271, 97
      %v313 = vpop.permute.xlu0 %312
      %vm314 = vcmask 793600
      %v315 = vsel %vm314, %v309, %v311
      %v316 = vsel %vm314, %v311, %v313
      %v319 = vsel %vm274, %v315, 0.0
      %v320 = vsel %vm275, %v316, 0.0
      %321 = vrot.lane.b32.xlu0 %v270, 95
      %v322 = vpop.permute.xlu0 %321
      %323 = vrot.lane.b32.xlu0 %v267, 95
      %v324 = vpop.permute.xlu0 %323
      %325 = vrot.lane.b32.xlu0 %v271, 95
      %v326 = vpop.permute.xlu0 %325
      %vm327 = vcmask 777216
      %v328 = vsel %vm327, %v322, %v324
      %v329 = vsel %vm327, %v324, %v326
      %v332 = vsel %vm293, %v328, 0.0
      %v333 = vsel %vm294, %v329, 0.0
      %334 = vrot.lane.b32.xlu0 %v270, 81
      %v335 = vpop.permute.xlu0 %334
      %336 = vrot.lane.b32.xlu0 %v267, 81
      %v337 = vpop.permute.xlu0 %336
      %338 = vrot.lane.b32.xlu0 %v271, 81
      %v339 = vpop.permute.xlu0 %338
      %vm340 = vcmask 662528
      %v341 = vsel %vm340, %v335, %v337
      %v342 = vsel %vm340, %v337, %v339
      %v345 = vsel %vm274, %v341, 0.0
      %v346 = vsel %vm275, %v342, 0.0
      %347 = vrot.lane.b32.xlu0 %v270, 79
      %v348 = vpop.permute.xlu0 %347
      %349 = vrot.lane.b32.xlu0 %v267, 79
      %v350 = vpop.permute.xlu0 %349
      %351 = vrot.lane.b32.xlu0 %v271, 79
      %v352 = vpop.permute.xlu0 %351
      %vm353 = vcmask 646144
      %v354 = vsel %vm353, %v348, %v350
      %v355 = vsel %vm353, %v350, %v352
      %v358 = vsel %vm293, %v354, 0.0
      %v359 = vsel %vm294, %v355, 0.0
      %v360 = vrot.slane %v270, 4
      %v361 = vrot.slane %v267, 4
      %v362 = vrot.slane %v271, 4
      %363 = vrot.lane.b32.xlu0 %v360, 112
      %v364 = vpop.permute.xlu0 %363
      %365 = vrot.lane.b32.xlu0 %v361, 112
      %v366 = vpop.permute.xlu0 %365
      %367 = vrot.lane.b32.xlu0 %v362, 112
      %v368 = vpop.permute.xlu0 %367
      %vm369 = vcmask 916480
      %v370 = vsel %vm369, %v364, %v366
      %v371 = vsel %vm369, %v366, %v368
      %v376 = vrot.slane %v319, 4
      %v377 = vrot.slane %v320, 4
      %380 = vrot.lane.b32.xlu0 %v270, 96
      %v381 = vpop.permute.xlu0 %380
      %382 = vrot.lane.b32.xlu0 %v267, 96
      %v383 = vpop.permute.xlu0 %382
      %384 = vrot.lane.b32.xlu0 %v271, 96
      %v385 = vpop.permute.xlu0 %384
      %vm386 = vcmask 785408
      %v387 = vsel %vm386, %v381, %v383
      %v388 = vsel %vm386, %v383, %v385
      %v393 = vrot.slane %v332, 4
      %v394 = vrot.slane %v333, 4
      %397 = vrot.lane.b32.xlu0 %v360, 80
      %v398 = vpop.permute.xlu0 %397
      %399 = vrot.lane.b32.xlu0 %v361, 80
      %v400 = vpop.permute.xlu0 %399
      %401 = vrot.lane.b32.xlu0 %v362, 80
      %v402 = vpop.permute.xlu0 %401
      %vm403 = vcmask 654336
      %v404 = vsel %vm403, %v398, %v400
      %v405 = vsel %vm403, %v400, %v402
      %vm408 = vcmask 1043456
      %v409 = vsel %vm408, %v289, %v370
      %v410 = vsel %vm408, %v290, %v371
      %v411 = vsel %vm408, %v306, %v376
      %v412 = vsel %vm408, %v307, %v377
      %v413 = vsel %vm408, %v387, %v393
      %v414 = vsel %vm408, %v388, %v394
      %v415 = vsel %vm408, %v345, %v404
      %v416 = vsel %vm408, %v346, %v405
      %v417 = vld [vmem:[%s2] sm:$0xff]
      %419 = vset.pattern.permute.xlu0 0
      %420 = vperm.xlu0 %419, %v417
      %v421 = vpop.permute.xlu0 %420
      %vm423 = vcmask 293888
      %v425 = vsel %vm423, %v257, 0
      %v428 = vsel %vm408, %v358, 0
      %v431 = vsel %vm408, %v359, 0
      %433 = vmatpush.msra.mxu0 0.0
      %434 = vmatpush.msra.mxu0 0.0
      %435 = vmatpush.msra.mxu0 0.0
      %436 = vmatpush.msra.mxu0 0.0
      %437 = vmatpush.msra.mxu0 0.0
      %438 = vmatpush.msra.mxu0 0.0
      %439 = vmatpush.msra.mxu0 0.0
      %440 = vmatpush.msra.mxu0 0.0
      %441 = vmatpush.msra.mxu0 0.0
      %442 = vmatpush.msra.mxu0 0.0
      %443 = vmatpush.msra.mxu0 0.0
      %444 = vmatpush.msra.mxu0 %v428
      %445 = vmatpush.msra.mxu0 %v415
      %446 = vmatpush.msra.mxu0 %v413
      %447 = vmatpush.msra.mxu0 %v411
      %448 = vmatpush.msra.mxu0 %v409
      %449 = vmatmul.f32.gmra.mxu0 %v425
      %v450 = vpop.f32.mrf.mxu0
      %v451 = vadd.f32 %v421, %v450
      %452 = vdwg.mxu0
      %453 = vmatpush.msra.mxu0 0.0
      %454 = vmatpush.msra.mxu0 0.0
      %455 = vmatpush.msra.mxu0 0.0
      %456 = vmatpush.msra.mxu0 0.0
      %457 = vmatpush.msra.mxu0 0.0
      %458 = vmatpush.msra.mxu0 0.0
      %459 = vmatpush.msra.mxu0 0.0
      %460 = vmatpush.msra.mxu0 0.0
      %461 = vmatpush.msra.mxu0 0.0
      %462 = vmatpush.msra.mxu0 0.0
      %463 = vmatpush.msra.mxu0 0.0
      %464 = vmatpush.msra.mxu0 %v431
      %465 = vmatpush.msra.mxu0 %v416
      %466 = vmatpush.msra.mxu0 %v414
      %467 = vmatpush.msra.mxu0 %v412
      %468 = vmatpush.msra.mxu0 %v410
      %469 = vmatmul.f32.gmra.mxu0 %v425
      %v470 = vpop.f32.mrf.mxu0
      %v471 = vadd.f32 %v421, %v470
      %472 = vdwg.mxu0
      %v473 = vmax.f32 %v451, 0.0
      %v474 = vmax.f32 %v471, 0.0
      %v475 = vld [vmem:[%s3] sm:$0xf]
      %478 = vrot.lane.b32.xlu0 %v473, 32
      %v479 = vpop.permute.xlu0 %478
      %480 = vrot.lane.b32.xlu0 %v474, 32
      %v481 = vpop.permute.xlu0 %480
      %v482 = vsel %vm266, %v479, %v481
      %v485 = vsel %vm266, 0.0, %v479
      %v486 = vsel %vm266, %v481, 0.0
      %489 = vrot.lane.b32.xlu0 %v485, 113
      %v490 = vpop.permute.xlu0 %489
      %491 = vrot.lane.b32.xlu0 %v482, 113
      %v492 = vpop.permute.xlu0 %491
      %493 = vrot.lane.b32.xlu0 %v486, 113
      %v494 = vpop.permute.xlu0 %493
      %v495 = vsel %vm284, %v490, %v492
      %v496 = vsel %vm284, %v492, %v494
      %v499 = vsel %vm274, %v495, 0.0
      %v500 = vsel %vm275, %v496, 0.0
      %501 = vrot.lane.b32.xlu0 %v485, 111
      %v502 = vpop.permute.xlu0 %501
      %503 = vrot.lane.b32.xlu0 %v482, 111
      %v504 = vpop.permute.xlu0 %503
      %505 = vrot.lane.b32.xlu0 %v486, 111
      %v506 = vpop.permute.xlu0 %505
      %v507 = vsel %vm301, %v502, %v504
      %v508 = vsel %vm301, %v504, %v506
      %v511 = vsel %vm293, %v507, 0.0
      %v512 = vsel %vm294, %v508, 0.0
      %513 = vrot.lane.b32.xlu0 %v485, 97
      %v514 = vpop.permute.xlu0 %513
      %515 = vrot.lane.b32.xlu0 %v482, 97
      %v516 = vpop.permute.xlu0 %515
      %517 = vrot.lane.b32.xlu0 %v486, 97
      %v518 = vpop.permute.xlu0 %517
      %v519 = vsel %vm314, %v514, %v516
      %v520 = vsel %vm314, %v516, %v518
      %v523 = vsel %vm274, %v519, 0.0
      %v524 = vsel %vm275, %v520, 0.0
      %525 = vrot.lane.b32.xlu0 %v485, 95
      %v526 = vpop.permute.xlu0 %525
      %527 = vrot.lane.b32.xlu0 %v482, 95
      %v528 = vpop.permute.xlu0 %527
      %529 = vrot.lane.b32.xlu0 %v486, 95
      %v530 = vpop.permute.xlu0 %529
      %v531 = vsel %vm327, %v526, %v528
      %v532 = vsel %vm327, %v528, %v530
      %v535 = vsel %vm293, %v531, 0.0
      %v536 = vsel %vm294, %v532, 0.0
      %537 = vrot.lane.b32.xlu0 %v485, 81
      %v538 = vpop.permute.xlu0 %537
      %539 = vrot.lane.b32.xlu0 %v482, 81
      %v540 = vpop.permute.xlu0 %539
      %541 = vrot.lane.b32.xlu0 %v486, 81
      %v542 = vpop.permute.xlu0 %541
      %v543 = vsel %vm340, %v538, %v540
      %v544 = vsel %vm340, %v540, %v542
      %v547 = vsel %vm274, %v543, 0.0
      %v548 = vsel %vm275, %v544, 0.0
      %549 = vrot.lane.b32.xlu0 %v485, 79
      %v550 = vpop.permute.xlu0 %549
      %551 = vrot.lane.b32.xlu0 %v482, 79
      %v552 = vpop.permute.xlu0 %551
      %553 = vrot.lane.b32.xlu0 %v486, 79
      %v554 = vpop.permute.xlu0 %553
      %v555 = vsel %vm353, %v550, %v552
      %v556 = vsel %vm353, %v552, %v554
      %v559 = vsel %vm293, %v555, 0.0
      %v560 = vsel %vm294, %v556, 0.0
      %561 = vrot.lane.b32.xlu0 %v485, 112
      %v562 = vpop.permute.xlu0 %561
      %563 = vrot.lane.b32.xlu0 %v482, 112
      %v564 = vpop.permute.xlu0 %563
      %565 = vrot.lane.b32.xlu0 %v486, 112
      %v566 = vpop.permute.xlu0 %565
      %v567 = vsel %vm369, %v562, %v564
      %v568 = vsel %vm369, %v564, %v566
      %571 = vrot.lane.b32.xlu0 %v485, 96
      %v572 = vpop.permute.xlu0 %571
      %573 = vrot.lane.b32.xlu0 %v482, 96
      %v574 = vpop.permute.xlu0 %573
      %575 = vrot.lane.b32.xlu0 %v486, 96
      %v576 = vpop.permute.xlu0 %575
      %v577 = vsel %vm386, %v572, %v574
      %v578 = vsel %vm386, %v574, %v576
      %581 = vrot.lane.b32.xlu0 %v485, 80
      %v582 = vpop.permute.xlu0 %581
      %583 = vrot.lane.b32.xlu0 %v482, 80
      %v584 = vpop.permute.xlu0 %583
      %585 = vrot.lane.b32.xlu0 %v486, 80
      %v586 = vpop.permute.xlu0 %585
      %v587 = vsel %vm403, %v582, %v584
      %v588 = vsel %vm403, %v584, %v586
      %v591 = vld [vmem:[%s4] sm:$0xf]
      %593 = vset.pattern.permute.xlu0 0
      %594 = vperm.xlu0 %593, %v591
      %v595 = vpop.permute.xlu0 %594
      %vm597 = vcmask 588800
      %v599 = vsel %vm597, %v475, 0
      %601 = vmatpush.msra.mxu0 0.0
      %602 = vmatpush.msra.mxu0 0.0
      %603 = vmatpush.msra.mxu0 0.0
      %604 = vmatpush.msra.mxu0 0.0
      %605 = vmatpush.msra.mxu0 0.0
      %606 = vmatpush.msra.mxu0 0.0
      %607 = vmatpush.msra.mxu0 0.0
      %608 = vmatpush.msra.mxu0 %v559
      %609 = vmatpush.msra.mxu0 %v587
      %610 = vmatpush.msra.mxu0 %v547
      %611 = vmatpush.msra.mxu0 %v535
      %612 = vmatpush.msra.mxu0 %v577
      %613 = vmatpush.msra.mxu0 %v523
      %614 = vmatpush.msra.mxu0 %v511
      %615 = vmatpush.msra.mxu0 %v567
      %616 = vmatpush.msra.mxu0 %v499
      %617 = vmatmul.f32.gmra.mxu0 %v599
      %v618 = vpop.f32.mrf.mxu0
      %v619 = vadd.f32 %v595, %v618
      %620 = vdwg.mxu0
      %621 = vmatpush.msra.mxu0 0.0
      %622 = vmatpush.msra.mxu0 0.0
      %623 = vmatpush.msra.mxu0 0.0
      %624 = vmatpush.msra.mxu0 0.0
      %625 = vmatpush.msra.mxu0 0.0
      %626 = vmatpush.msra.mxu0 0.0
      %627 = vmatpush.msra.mxu0 0.0
      %628 = vmatpush.msra.mxu0 %v560
      %629 = vmatpush.msra.mxu0 %v588
      %630 = vmatpush.msra.mxu0 %v548
      %631 = vmatpush.msra.mxu0 %v536
      %632 = vmatpush.msra.mxu0 %v578
      %633 = vmatpush.msra.mxu0 %v524
      %634 = vmatpush.msra.mxu0 %v512
      %635 = vmatpush.msra.mxu0 %v568
      %636 = vmatpush.msra.mxu0 %v500
      %637 = vmatmul.f32.gmra.mxu0 %v599
      %v638 = vpop.f32.mrf.mxu0
      %v639 = vadd.f32 %v595, %v638
      %640 = vdwg.mxu0
      %v641 = vmax.f32 %v619, 0.0
      %v642 = vmax.f32 %v639, 0.0
      %v645 = vrot.slane %v642, 4
      %v646 = vsel %vm408, %v641, %v645
      %648 = vst [vmem:[%s224] sm:$0xff] %v646
      %p649 = scmp.lt.s32.totalorder %s16, 1
      %s650 = scalar_select %p649, %s16, 1
      %s651 = smul.addr %s650, 2
      %s652 = smul.addr %s651, 4
      %s653 = scalar_lea.vmem %s5, %s652
      // Predicated region
      $region41: #{compressnn_forward.1} parent=39 // pred_check
        %p654 = pneg %p144
      $region42: #{compressnn_forward.1} parent=39 // pred_check_branch
        %656 = sbr.rel (%p654) target = $region44
      $region43: #{compressnn_forward.1} parent=39 // pred_region
        _
      $region44: #{compressnn_forward.1} parent=39 // pred_fallthru
        _
    $region40: #{compressnn_forward.1} parent=5 // pred_fallthru
      _
    %p657 = scmp.le.s32.totalorder 2, %s11
    // Predicated region
    $region45: #{compressnn_forward.1} parent=5 // pred_check
      %p658 = pneg %p657
    $region46: #{compressnn_forward.1} parent=5 // pred_check_branch
      %660 = sbr.rel (%p658) target = $region48
    $region47: #{compressnn_forward.1} parent=5 // pred_region
      %s661 = ssub.s32 %s11, 2
      // Predicated region
      $region49: #{compressnn_forward.1} parent=47 // pred_check
        %p662 = pneg %p150
      $region50: #{compressnn_forward.1} parent=47 // pred_check_branch
        %664 = sbr.rel (%p662) target = $region52
      $region51: #{compressnn_forward.1} parent=47 // pred_region
        %p665 = scmp.lt.s32.totalorder %s17, 1
        %s666 = scalar_select %p665, %s17, 1
        %s667 = smul.addr %s666, 2
        %s668 = smul.addr %s667, 4
        %s669 = scalar_lea.vmem %s5, %s668
      $region52: #{compressnn_forward.1} parent=47 // pred_fallthru
        _
    $region48: #{compressnn_forward.1} parent=5 // pred_fallthru
      _
  $region6: #{compressnn_forward.1} parent=0 // loop_footer
    %s15 = sadd.s32 1, %s11
  $region7: #{compressnn_forward.1} parent=0 // loop_footer_branch
    %10 = sbr.rel target = $region3
  $region8: #{compressnn_forward.1} parent=0 // loop_exit
    _

</llo_original>
